<compile_context>
chip_gen: v7x
topology: tpu7x:2x2x1
jax: 0.10.0
libtpu: 0.0.40
codegen_flags: <defaults>
</compile_context>

<pallas_src>
import functools
import math

import jax
import jax.numpy as jnp
from jax import lax
from jax.experimental import pallas as pl
from jax.experimental.pallas import tpu as pltpu


# Explicit scoped-VMEM budget: > v5e's 16 MiB default, < v7x's 64 MiB physical.
_VMEM_LIMIT_BYTES = 48 * 1024 * 1024


# ---------------------------------------------------------------------------
# Tiling helpers
# ---------------------------------------------------------------------------
def _round_up(n, m):
    return ((n + m - 1) // m) * m


def _tile_and_pad(n, target):
    """Sequence tile (multiple of 8, <= ~target) and padded length (multiple of tile)."""
    if n <= target:
        t = _round_up(n, 8)
        return t, t
    t = _round_up(target, 8)
    return t, _round_up(n, t)


def _pick_contract_tile(din, target):
    """Largest multiple-of-128 divisor of din <= target, else full din.

    A non-full last block dim must be a multiple of 128 (lane constraint), so
    the contraction tile is 128-aligned or the full dimension."""
    if din <= target or din % 128 != 0:
        return din
    t = (min(target, din) // 128) * 128
    while t >= 128:
        if din % t == 0:
            return t
        t -= 128
    return din


def _default_mxu_dtype(dtype):
    # f32 matmul runs at a fraction of the bf16 MXU rate; accumulate in f32.
    return jnp.bfloat16 if dtype == jnp.float32 else dtype


# ---------------------------------------------------------------------------
# BatchLinear (bias=False): one big flattened matmul, tiled over rows and the
# contraction dimension, with a pre-transposed (Din, Dout) weight.
# ---------------------------------------------------------------------------
def _batch_linear_kernel(x_ref, wt_ref, o_ref, acc_ref, *, mxu_dtype):
    kk = pl.program_id(1)

    @pl.when(kk == 0)
    def _init():
        acc_ref[...] = jnp.zeros_like(acc_ref)

    acc_ref[...] += jnp.dot(
        x_ref[...].astype(mxu_dtype),
        wt_ref[...].astype(mxu_dtype),
        preferred_element_type=jnp.float32,
    )

    @pl.when(kk == pl.num_programs(1) - 1)
    def _finalize():
        o_ref[...] = acc_ref[...].astype(o_ref.dtype)


def batch_linear(x, w, *, row_tile_target=512, contract_tile_target=1024,
                 mxu_dtype=None):
    """Apply nn.Linear(bias=False) with weight w (Dout, Din) to x (B, N, Din)."""
    B, N, Din = x.shape
    Dout = w.shape[0]
    dtype = x.dtype
    if mxu_dtype is None:
        mxu_dtype = _default_mxu_dtype(dtype)

    rows = B * N
    x2 = x.reshape(rows, Din)
    # One-time host-side transpose so the resident RHS streams in natural
    # (k, col) layout with the output lane dim = Dout.
    wt = w.T  # (Din, Dout)

    tr, rows_pad = _tile_and_pad(rows, row_tile_target)
    if rows_pad != rows:
        x2 = jnp.pad(x2, ((0, rows_pad - rows), (0, 0)))
    tdk = _pick_contract_tile(Din, contract_tile_target)

    grid = (rows_pad // tr, Din // tdk)
    kernel = functools.partial(_batch_linear_kernel, mxu_dtype=mxu_dtype)
    out = pl.pallas_call(
        kernel,
        out_shape=jax.ShapeDtypeStruct((rows_pad, Dout), dtype),
        grid_spec=pltpu.PrefetchScalarGridSpec(
            num_scalar_prefetch=0,
            grid=grid,
            in_specs=[
                pl.BlockSpec((tr, tdk), lambda r, kk: (r, kk)),
                pl.BlockSpec((tdk, Dout), lambda r, kk: (kk, 0)),
            ],
            out_specs=pl.BlockSpec((tr, Dout), lambda r, kk: (r, 0)),
            scratch_shapes=[pltpu.VMEM((tr, Dout), jnp.float32)],
        ),
        compiler_params=pltpu.CompilerParams(
            dimension_semantics=("parallel", "arbitrary"),
            vmem_limit_bytes=_VMEM_LIMIT_BYTES),
    )(x2, wt)
    if rows_pad != rows:
        out = out[:rows]
    return out.reshape(B, N, Dout)


# ---------------------------------------------------------------------------
# Flash-style batched dot-product attention (online softmax over the K axis).
# ---------------------------------------------------------------------------
def _flash_attn_kernel(q_ref, k_ref, v_ref, o_ref,
                       qs_sc, m_sc, l_sc, acc_sc, *,
                       scale, mxu_dtype, k_tile, nk_valid):
    ki = pl.program_id(2)

    @pl.when(ki == 0)
    def _init():
        # Scale q by 1/sqrt(dk) ONCE per (b, qi) block (q is resident across
        # the K axis), cast to the MXU dtype, and reuse from VMEM scratch.
        qs_sc[...] = (q_ref[...].astype(jnp.float32) * scale).astype(mxu_dtype)
        m_sc[...] = jnp.full_like(m_sc, -jnp.inf)
        l_sc[...] = jnp.zeros_like(l_sc)
        acc_sc[...] = jnp.zeros_like(acc_sc)

    # s = (q * scale) @ k.T without an explicit transpose: contract last dims.
    s = lax.dot_general(
        qs_sc[...], k_ref[...].astype(mxu_dtype),
        dimension_numbers=(((1,), (1,)), ((), ())),
        preferred_element_type=jnp.float32)                 # (tq, tk) f32

    if nk_valid is not None:
        # Key padding: mask padded key columns before the online softmax.
        kpos = ki * k_tile + lax.broadcasted_iota(jnp.int32, s.shape, 1)
        s = jnp.where(kpos < nk_valid, s, -1e30)

    m_prev = m_sc[...]
    m_new = jnp.maximum(m_prev, jnp.max(s, axis=-1, keepdims=True))
    alpha = jnp.exp(m_prev - m_new)
    p = jnp.exp(s - m_new)
    l_sc[...] = alpha * l_sc[...] + jnp.sum(p, axis=-1, keepdims=True)
    acc_sc[...] = alpha * acc_sc[...] + jnp.dot(
        p.astype(mxu_dtype), v_ref[...].astype(mxu_dtype),
        preferred_element_type=jnp.float32)
    m_sc[...] = m_new

    @pl.when(ki == pl.num_programs(2) - 1)
    def _finalize():
        inv_l = pl.reciprocal(l_sc[...], approx=True)       # EUP slot, not VALU
        o_ref[...] = (acc_sc[...] * inv_l).astype(o_ref.dtype)


def _attention(queries, keys, values, *, q_tile_target=512, k_tile_target=512,
               mxu_dtype=None):
    B, Nq, Dk = queries.shape
    _, Nk, _ = keys.shape
    Dv = values.shape[-1]
    dtype = queries.dtype
    if mxu_dtype is None:
        mxu_dtype = _default_mxu_dtype(dtype)

    tq, nq_pad = _tile_and_pad(Nq, q_tile_target)
    tk, nk_pad = _tile_and_pad(Nk, k_tile_target)
    if nq_pad != Nq:
        # Padded query rows produce garbage rows that are sliced off below.
        queries = jnp.pad(queries, ((0, 0), (0, nq_pad - Nq), (0, 0)))
    if nk_pad != Nk:
        # Padded key columns are masked to -1e30 inside the kernel.
        keys = jnp.pad(keys, ((0, 0), (0, nk_pad - Nk), (0, 0)))
        values = jnp.pad(values, ((0, 0), (0, nk_pad - Nk), (0, 0)))

    grid = (B, nq_pad // tq, nk_pad // tk)
    scale = 1.0 / math.sqrt(Dk)  # real Dk, independent of any padding
    kernel = functools.partial(
        _flash_attn_kernel, scale=scale, mxu_dtype=mxu_dtype, k_tile=tk,
        nk_valid=(Nk if nk_pad != Nk else None))

    # Note: for very small Dv (< 128) the output store is a masked partial
    # store; padding Dv to 128 in the wrapper would make it lane-dense, but at
    # these sizes the store tail is negligible next to K/V streaming.
    out = pl.pallas_call(
        kernel,
        out_shape=jax.ShapeDtypeStruct((B, nq_pad, Dv), dtype),
        grid_spec=pltpu.PrefetchScalarGridSpec(
            num_scalar_prefetch=0,
            grid=grid,
            in_specs=[
                pl.BlockSpec((None, tq, Dk), lambda b, qi, ki: (b, qi, 0)),
                pl.BlockSpec((None, tk, Dk), lambda b, qi, ki: (b, ki, 0)),
                pl.BlockSpec((None, tk, Dv), lambda b, qi, ki: (b, ki, 0)),
            ],
            out_specs=pl.BlockSpec((None, tq, Dv), lambda b, qi, ki: (b, qi, 0)),
            scratch_shapes=[
                pltpu.VMEM((tq, Dk), mxu_dtype),     # scaled q (resident over K)
                pltpu.VMEM((tq, 1), jnp.float32),    # running max
                pltpu.VMEM((tq, 1), jnp.float32),    # running denom
                pltpu.VMEM((tq, Dv), jnp.float32),   # output accumulator
            ],
        ),
        compiler_params=pltpu.CompilerParams(
            dimension_semantics=("parallel", "parallel", "arbitrary"),
            vmem_limit_bytes=_VMEM_LIMIT_BYTES),
    )(queries, keys, values)
    if nq_pad != Nq:
        out = out[:, :Nq, :]
    return out


def dot_prod_attention(keys, queries, values, params=None, *, mxu_dtype=None):
    """Pallas implementation of DotProdAttention.forward.

    params: None (linear_transform=False) or dict with nn.Linear-style weights
            'wk' (Dk,Dk), 'wq' (Dk,Dk), 'wv' (Dv,Dv)  (linear_transform=True).
    mxu_dtype: dtype fed to the MXU (default bf16 for f32 inputs; pass
            jnp.float32 for bit-tight comparisons).
    """
    if params is not None:
        # Projections hoisted out of the attention loop: one large (B*N, D)
        # matmul each instead of tiny per-batch matmuls.
        keys = batch_linear(keys, params["wk"], mxu_dtype=mxu_dtype)
        queries = batch_linear(queries, params["wq"], mxu_dtype=mxu_dtype)
        values = batch_linear(values, params["wv"], mxu_dtype=mxu_dtype)
    return _attention(queries, keys, values, mxu_dtype=mxu_dtype)


# ---------------------------------------------------------------------------
# Pure-JAX reference + test
# ---------------------------------------------------------------------------
def _reference(keys, queries, values, params=None):
    if params is not None:
        keys = keys @ params["wk"].T
        queries = queries @ params["wq"].T
        values = values @ params["wv"].T
    dk = keys.shape[-1]
    logits = jnp.einsum("bqd,bkd->bqk", queries, keys) / math.sqrt(dk)
    w = jax.nn.softmax(logits, axis=-1)
    return jnp.einsum("bqk,bkd->bqd", w, values)


def _xavier_normal(key, out_f, in_f):
    std = math.sqrt(2.0 / (in_f + out_f))
    return std * jax.random.normal(key, (out_f, in_f), dtype=jnp.float32)


if __name__ == "__main__":
    # Small shapes consistent with the module's forward.
    B, Nk, Nq = 2, 8, 8
    embedding_dim, values_dim = 32, 32

    root = jax.random.PRNGKey(0)
    kk, kq, kv, kwk, kwq, kwv, kk2, kq2, kv2 = jax.random.split(root, 9)

    keys = jax.random.normal(kk, (B, Nk, embedding_dim), dtype=jnp.float32)
    queries = jax.random.normal(kq, (B, Nq, embedding_dim), dtype=jnp.float32)
    values = jax.random.normal(kv, (B, Nk, values_dim), dtype=jnp.float32)

    params = {
        "wk": _xavier_normal(kwk, embedding_dim, embedding_dim),
        "wq": _xavier_normal(kwq, embedding_dim, embedding_dim),
        "wv": _xavier_normal(kwv, values_dim, values_dim),
    }

    # --- Exact-precision checks (mxu_dtype=f32): tolerance 2e-3 covers the
    # EUP approximate reciprocal (~1e-4 relative) used in the softmax divide.
    out_plain = jax.block_until_ready(
        dot_prod_attention(keys, queries, values, params=None,
                           mxu_dtype=jnp.float32))
    ref_plain = _reference(keys, queries, values, params=None)
    assert out_plain.shape == (B, Nq, values_dim)
    assert jnp.allclose(out_plain, ref_plain, atol=2e-3, rtol=2e-3)

    out_lt = jax.block_until_ready(
        dot_prod_attention(keys, queries, values, params=params,
                           mxu_dtype=jnp.float32))
    ref_lt = _reference(keys, queries, values, params=params)
    assert out_lt.shape == (B, Nq, values_dim)
    assert jnp.allclose(out_lt, ref_lt, atol=2e-3, rtol=2e-3)

    # --- Default fast path (bf16 MXU operands, f32 accumulation): looser
    # tolerance for bf16 operand rounding (~4e-3 relative per element).
    out_bf16 = jax.block_until_ready(
        dot_prod_attention(keys, queries, values, params=params))
    assert out_bf16.shape == (B, Nq, values_dim)
    assert jnp.allclose(out_bf16, ref_lt, atol=6e-2, rtol=6e-2)

    # --- Ragged (non-multiple-of-8) sequence lengths: exercises the padding +
    # key-masking path, checked at tight tolerance with f32 MXU operands.
    Nq_r, Nk_r = 12, 10
    keys_r = jax.random.normal(kk2, (B, Nk_r, embedding_dim), dtype=jnp.float32)
    queries_r = jax.random.normal(kq2, (B, Nq_r, embedding_dim), dtype=jnp.float32)
    values_r = jax.random.normal(kv2, (B, Nk_r, values_dim), dtype=jnp.float32)
    out_r = jax.block_until_ready(
        dot_prod_attention(keys_r, queries_r, values_r, params=None,
                           mxu_dtype=jnp.float32))
    ref_r = _reference(keys_r, queries_r, values_r, params=None)
    assert out_r.shape == (B, Nq_r, values_dim)
    assert jnp.allclose(out_r, ref_r, atol=2e-3, rtol=2e-3)

    print("KERNEL_OK")
</pallas_src>

<mosaic_0001>
module attributes {stable_mosaic.version = 11 : i64} {
  func.func @_flash_attn_kernel(%arg0: i32, %arg1: i32, %arg2: i32, %arg3: memref<1x8x32xf32, #tpu.memory_space<vmem>>, %arg4: memref<1x8x32xf32, #tpu.memory_space<vmem>>, %arg5: memref<1x8x32xf32, #tpu.memory_space<vmem>>, %arg6: memref<1x8x32xf32, #tpu.memory_space<vmem>>, %arg7: memref<8x32xf32, #tpu.memory_space<vmem>>, %arg8: memref<8x1xf32, #tpu.memory_space<vmem>>, %arg9: memref<8x1xf32, #tpu.memory_space<vmem>>, %arg10: memref<8x32xf32, #tpu.memory_space<vmem>>) attributes {dimension_semantics = [#tpu.dimension_semantics<parallel>, #tpu.dimension_semantics<parallel>, #tpu.dimension_semantics<arbitrary>], iteration_bounds = array<i64: 2, 1, 1>, scalar_prefetch = 0 : i64, scratch_operands = 4 : i64, tpu.core_type = #tpu.core_type<tc>, window_params = [{transform_indices = @transform_0, window_bounds = array<i64: 1, 8, 32>}, {transform_indices = @transform_1, window_bounds = array<i64: 1, 8, 32>}, {transform_indices = @transform_2, window_bounds = array<i64: 1, 8, 32>}, {transform_indices = @transform_3, window_bounds = array<i64: 1, 8, 32>}]} {
    %c0_i32 = arith.constant 0 : i32
    %0 = arith.cmpi eq, %arg2, %c0_i32 : i32
    %1 = arith.extui %0 : i1 to i32
    %c0_i32_0 = arith.constant 0 : i32
    %2 = arith.cmpi ne, %1, %c0_i32_0 : i32
    scf.if %2 {
      %c0_25 = arith.constant 0 : index
      %c0_26 = arith.constant 0 : index
      %c0_27 = arith.constant 0 : index
      %34 = vector.load %arg3[%c0_25, %c0_26, %c0_27] : memref<1x8x32xf32, #tpu.memory_space<vmem>>, vector<1x8x32xf32>
      %35 = vector.shape_cast %34 : vector<1x8x32xf32> to vector<8x32xf32>
      %cst_28 = arith.constant 0.176776692 : f32
      %36 = vector.broadcast %cst_28 : f32 to vector<8x32xf32>
      %37 = arith.mulf %35, %36 : vector<8x32xf32>
      %c0_29 = arith.constant 0 : index
      %c0_30 = arith.constant 0 : index
      %38 = vector.load %arg7[%c0_29, %c0_30] : memref<8x32xf32, #tpu.memory_space<vmem>>, vector<8x32xf32>
      tpu.vector_store %arg7[%c0_29, %c0_30], %37 {strides = array<i32>} : memref<8x32xf32, #tpu.memory_space<vmem>>, vector<8x32xf32>,
      %cst_31 = arith.constant 0xFF800000 : f32
      %39 = vector.broadcast %cst_31 : f32 to vector<8x1xf32>
      %c0_32 = arith.constant 0 : index
      %c0_33 = arith.constant 0 : index
      %40 = vector.load %arg8[%c0_32, %c0_33] : memref<8x1xf32, #tpu.memory_space<vmem>>, vector<8x1xf32>
      tpu.vector_store %arg8[%c0_32, %c0_33], %39 {strides = array<i32>} : memref<8x1xf32, #tpu.memory_space<vmem>>, vector<8x1xf32>,
      %cst_34 = arith.constant 0.000000e+00 : f32
      %41 = vector.broadcast %cst_34 : f32 to vector<8x1xf32>
      %c0_35 = arith.constant 0 : index
      %c0_36 = arith.constant 0 : index
      %42 = vector.load %arg9[%c0_35, %c0_36] : memref<8x1xf32, #tpu.memory_space<vmem>>, vector<8x1xf32>
      tpu.vector_store %arg9[%c0_35, %c0_36], %41 {strides = array<i32>} : memref<8x1xf32, #tpu.memory_space<vmem>>, vector<8x1xf32>,
      %cst_37 = arith.constant 0.000000e+00 : f32
      %43 = vector.broadcast %cst_37 : f32 to vector<8x32xf32>
      %c0_38 = arith.constant 0 : index
      %c0_39 = arith.constant 0 : index
      %44 = vector.load %arg10[%c0_38, %c0_39] : memref<8x32xf32, #tpu.memory_space<vmem>>, vector<8x32xf32>
      tpu.vector_store %arg10[%c0_38, %c0_39], %43 {strides = array<i32>} : memref<8x32xf32, #tpu.memory_space<vmem>>, vector<8x32xf32>,
    } else {
    }
    %c0 = arith.constant 0 : index
    %c0_1 = arith.constant 0 : index
    %3 = vector.load %arg7[%c0, %c0_1] : memref<8x32xf32, #tpu.memory_space<vmem>>, vector<8x32xf32>
    %c0_2 = arith.constant 0 : index
    %c0_3 = arith.constant 0 : index
    %c0_4 = arith.constant 0 : index
    %4 = vector.load %arg4[%c0_2, %c0_3, %c0_4] : memref<1x8x32xf32, #tpu.memory_space<vmem>>, vector<1x8x32xf32>
    %5 = vector.shape_cast %4 : vector<1x8x32xf32> to vector<8x32xf32>
    %cst = arith.constant dense<0.000000e+00> : vector<8x8xf32>
    %6 = tpu.matmul %3, %5, %cst {dimension_numbers = #tpu.dot_dimension_numbers<[1], [1], [0], [0], [0, 0, 1, 0], [], []>} : vector<8x32xf32>, vector<8x32xf32>, vector<8x8xf32> -> vector<8x8xf32>
    %c0_5 = arith.constant 0 : index
    %c0_6 = arith.constant 0 : index
    %7 = vector.load %arg8[%c0_5, %c0_6] : memref<8x1xf32, #tpu.memory_space<vmem>>, vector<8x1xf32>
    %cst_7 = arith.constant dense<0xFF800000> : vector<8xf32>
    %8 = vector.multi_reduction <maximumf>, %6, %cst_7 [1] : vector<8x8xf32> to vector<8xf32>
    %9 = vector.shape_cast %8 : vector<8xf32> to vector<8x1xf32>
    %10 = arith.maximumf %7, %9 : vector<8x1xf32>
    %11 = arith.subf %7, %10 : vector<8x1xf32>
    %12 = math.exp %11 : vector<8x1xf32>
    %13 = vector.broadcast %10 : vector<8x1xf32> to vector<8x8xf32>
    %14 = arith.subf %6, %13 : vector<8x8xf32>
    %15 = math.exp %14 : vector<8x8xf32>
    %c0_8 = arith.constant 0 : index
    %c0_9 = arith.constant 0 : index
    %16 = vector.load %arg9[%c0_8, %c0_9] : memref<8x1xf32, #tpu.memory_space<vmem>>, vector<8x1xf32>
    %17 = arith.mulf %12, %16 : vector<8x1xf32>
    %cst_10 = arith.constant dense<0.000000e+00> : vector<8xf32>
    %18 = vector.multi_reduction <add>, %15, %cst_10 [1] : vector<8x8xf32> to vector<8xf32>
    %19 = vector.shape_cast %18 : vector<8xf32> to vector<8x1xf32>
    %20 = arith.addf %17, %19 : vector<8x1xf32>
    %c0_11 = arith.constant 0 : index
    %c0_12 = arith.constant 0 : index
    %21 = vector.load %arg9[%c0_11, %c0_12] : memref<8x1xf32, #tpu.memory_space<vmem>>, vector<8x1xf32>
    tpu.vector_store %arg9[%c0_11, %c0_12], %20 {strides = array<i32>} : memref<8x1xf32, #tpu.memory_space<vmem>>, vector<8x1xf32>,
    %c0_13 = arith.constant 0 : index
    %c0_14 = arith.constant 0 : index
    %22 = vector.load %arg10[%c0_13, %c0_14] : memref<8x32xf32, #tpu.memory_space<vmem>>, vector<8x32xf32>
    %23 = vector.broadcast %12 : vector<8x1xf32> to vector<8x32xf32>
    %24 = arith.mulf %23, %22 : vector<8x32xf32>
    %c0_15 = arith.constant 0 : index
    %c0_16 = arith.constant 0 : index
    %c0_17 = arith.constant 0 : index
    %25 = vector.load %arg5[%c0_15, %c0_16, %c0_17] : memref<1x8x32xf32, #tpu.memory_space<vmem>>, vector<1x8x32xf32>
    %26 = vector.shape_cast %25 : vector<1x8x32xf32> to vector<8x32xf32>
    %cst_18 = arith.constant dense<0.000000e+00> : vector<8x32xf32>
    %27 = tpu.matmul %15, %26, %cst_18 {dimension_numbers = #tpu.dot_dimension_numbers<[1], [0], [0], [1], [0, 0, 1, 1], [], []>} : vector<8x8xf32>, vector<8x32xf32>, vector<8x32xf32> -> vector<8x32xf32>
    %28 = arith.addf %24, %27 : vector<8x32xf32>
    %c0_19 = arith.constant 0 : index
    %c0_20 = arith.constant 0 : index
    %29 = vector.load %arg10[%c0_19, %c0_20] : memref<8x32xf32, #tpu.memory_space<vmem>>, vector<8x32xf32>
    tpu.vector_store %arg10[%c0_19, %c0_20], %28 {strides = array<i32>} : memref<8x32xf32, #tpu.memory_space<vmem>>, vector<8x32xf32>,
    %c0_21 = arith.constant 0 : index
    %c0_22 = arith.constant 0 : index
    %30 = vector.load %arg8[%c0_21, %c0_22] : memref<8x1xf32, #tpu.memory_space<vmem>>, vector<8x1xf32>
    tpu.vector_store %arg8[%c0_21, %c0_22], %10 {strides = array<i32>} : memref<8x1xf32, #tpu.memory_space<vmem>>, vector<8x1xf32>,
    %c0_i32_23 = arith.constant 0 : i32
    %31 = arith.cmpi eq, %arg2, %c0_i32_23 : i32
    %32 = arith.extui %31 : i1 to i32
    %c0_i32_24 = arith.constant 0 : i32
    %33 = arith.cmpi ne, %32, %c0_i32_24 : i32
    scf.if %33 {
      %c0_25 = arith.constant 0 : index
      %c0_26 = arith.constant 0 : index
      %34 = vector.load %arg9[%c0_25, %c0_26] : memref<8x1xf32, #tpu.memory_space<vmem>>, vector<8x1xf32>
      %35 = tpu.reciprocal %34 {approx = true} : vector<8x1xf32> -> vector<8x1xf32>
      %c0_27 = arith.constant 0 : index
      %c0_28 = arith.constant 0 : index
      %36 = vector.load %arg10[%c0_27, %c0_28] : memref<8x32xf32, #tpu.memory_space<vmem>>, vector<8x32xf32>
      %37 = vector.broadcast %35 : vector<8x1xf32> to vector<8x32xf32>
      %38 = arith.mulf %36, %37 : vector<8x32xf32>
      %c0_29 = arith.constant 0 : index
      %c0_30 = arith.constant 0 : index
      %c0_31 = arith.constant 0 : index
      %39 = vector.load %arg6[%c0_29, %c0_30, %c0_31] : memref<1x8x32xf32, #tpu.memory_space<vmem>>, vector<1x8x32xf32>
      %40 = vector.shape_cast %39 : vector<1x8x32xf32> to vector<8x32xf32>
      %41 = vector.shape_cast %38 : vector<8x32xf32> to vector<1x8x32xf32>
      tpu.vector_store %arg6[%c0_29, %c0_30, %c0_31], %41 {strides = array<i32>} : memref<1x8x32xf32, #tpu.memory_space<vmem>>, vector<1x8x32xf32>,
    } else {
    }
    return
  }
  func.func @transform_0(%arg0: i32, %arg1: i32, %arg2: i32) -> (i32, i32, i32) {
    %c0_i32 = arith.constant 0 : i32
    %c0_i32_0 = arith.constant 0 : i32
    return %arg0, %arg1, %c0_i32 : i32, i32, i32
  }
  func.func @transform_1(%arg0: i32, %arg1: i32, %arg2: i32) -> (i32, i32, i32) {
    %c0_i32 = arith.constant 0 : i32
    %c0_i32_0 = arith.constant 0 : i32
    return %arg0, %arg2, %c0_i32 : i32, i32, i32
  }
  func.func @transform_2(%arg0: i32, %arg1: i32, %arg2: i32) -> (i32, i32, i32) {
    %c0_i32 = arith.constant 0 : i32
    %c0_i32_0 = arith.constant 0 : i32
    return %arg0, %arg2, %c0_i32 : i32, i32, i32
  }
  func.func @transform_3(%arg0: i32, %arg1: i32, %arg2: i32) -> (i32, i32, i32) {
    %c0_i32 = arith.constant 0 : i32
    %c0_i32_0 = arith.constant 0 : i32
    return %arg0, %arg1, %c0_i32 : i32, i32, i32
  }
}

</mosaic_0001>

<llo_original>
// kernel: tpu_custom_call.1
$region0: #{tpu_custom_call.1}
  #allocation0 [shape = 'u32[]', space=smem, size = 0x4, offset = 0x4, fixed_abs, tag = 'smem constant byte address 0x4 - core index']
  #allocation1 [shape = 'u32[144,128]{1,0:T(1,128)}', space=vmem, size = 0x12000, scoped, tag = 'internal scratch']
  #allocation2 [shape = 'f32[8,32]{1,0:T(8,128)}', space=vmem, size = 0x1000, scoped, tag = 'scratch operand']
  #allocation3 [shape = 'f32[8,1]{1,0:T(8,128)}', space=vmem, size = 0x1000, scoped, tag = 'scratch operand']
  #allocation4 [shape = 'f32[8,1]{1,0:T(8,128)}', space=vmem, size = 0x1000, scoped, tag = 'scratch operand']
  #allocation5 [shape = 'f32[8,32]{1,0:T(8,128)}', space=vmem, size = 0x1000, scoped, tag = 'scratch operand']
  %s0 = inlined_call_operand.hbm [shape: f32[2,8,32], index: 0, kind: input, shape index: {}]
  %s1 = inlined_call_operand.hbm [shape: f32[2,8,32], index: 1, kind: input, shape index: {}]
  %s2 = inlined_call_operand.hbm [shape: f32[2,8,32], index: 2, kind: input, shape index: {}]
  %s3 = inlined_call_operand.hbm [shape: f32[2,8,32], index: 3, kind: output, shape index: {}]
  %s4 = sld [smem:[#allocation0]]
  $region65: #{tpu_custom_call.1} parent=0
    _
  %s6 = ssub.s32 1, %s4
  %s7 = scalar_select 0, %s6, %s4
  $region1: #{tpu_custom_call.1} parent=0
    #allocation6 [shape = 'u8[8192]{0}', space=vmem, size = 0x2000, scoped, tag = 'input window, operand 0']
    #allocation7 [shape = 's32[2]{0}', space=sflag, size = 0x8, scoped, tag = 'scoped memory for tpu_custom_call.1']
    #allocation8 [shape = 's32[2]{0}', space=sflag, size = 0x8, scoped, tag = 'scoped memory for tpu_custom_call.1']
    #allocation9 [shape = 'u8[8192]{0}', space=vmem, size = 0x2000, scoped, tag = 'input window, operand 1']
    #allocation10 [shape = 's32[2]{0}', space=sflag, size = 0x8, scoped, tag = 'scoped memory for tpu_custom_call.1']
    #allocation11 [shape = 'u8[8192]{0}', space=vmem, size = 0x2000, scoped, tag = 'input window, operand 2']
    #allocation12 [shape = 'u8[8192]{0}', space=vmem, size = 0x2000, scoped, tag = 'output window, operand 0']
    %8 = vsyncpa [#allocation7], 0
    %s9 = scalar_lea.sflag [#allocation7], 1
    %10 = vsyncpa %s9, 0
    %11 = vsyncpa [#allocation10], 0
    %s12 = scalar_lea.sflag [#allocation10], 1
    %13 = vsyncpa %s12, 0
    %14 = vsyncpa [#allocation8], 0
    %s15 = scalar_lea.sflag [#allocation8], 1
    %16 = vsyncpa %s15, 0
    loop: start=0, step=1, limit=4
    $region2: #{tpu_custom_call.1} parent=1 // loop_pre_header
      _
    $region3: #{tpu_custom_call.1} parent=1 // loop_header
      %s18 = sphi 0, %s22
      %p19 = scmp.ge.s32.totalorder %s18, 4
      %s25 = sphi 0, %s44
      %s26 = sphi 0, %s40
      %s27 = sphi 0, %s36
      %s28 = sphi 0, %s25
      %s29 = sphi 0, %s26
      %s30 = sphi 0, %s27
      %s31 = sphi 0, %s28
      %s32 = sphi 0, %s29
      %s33 = sphi 0, %s30
      %s49 = sphi 0, %s51
      %s52 = sphi 0, %s49
      %s53 = sphi 0, %s52
      %s69 = sphi 0, %s53
      %s77 = sphi 0, %s79
      %s80 = sphi 0, %s77
      %s81 = sphi 0, %s80
      %s97 = sphi 0, %s81
      %s105 = sphi 0, %s107
      %s108 = sphi 0, %s105
      %s109 = sphi 0, %s108
      %s125 = sphi 0, %s109
      %s133 = sphi 0, %s135
      %s136 = sphi 0, %s133
      %s137 = sphi 0, %s136
      %s153 = sphi 0, %s137
    $region4: #{tpu_custom_call.1} parent=1 // loop_header_branch
      %21 = sbr.rel (%p19) target = $region8
    $region5: #{tpu_custom_call.1} parent=1 // loop_body
      %s23 = ssub.s32 %s18, 1
      %s24 = ssub.s32 %s18, 2
      %s34 = sadd.s32 1, %s27
      %p35 = scmp.ge.s32.totalorder %s34, 1
      %s36 = scalar_select %p35, 0, %s34
      %s37 = sadd.s32 1, %s26
      %s38 = scalar_select %p35, %s37, %s26
      %p39 = scmp.ge.s32.totalorder %s38, 1
      %s40 = scalar_select %p39, 0, %s38
      %s41 = sadd.s32 1, %s25
      %s42 = scalar_select %p39, %s41, %s25
      %p43 = scmp.ge.s32.totalorder %s42, 2
      %s44 = scalar_select %p43, 0, %s42
      %s45 = ssub.s32 %s25, %s44
      %s46 = ssub.s32 %s26, %s40
      %s47 = sor.u32 %s45, %s46
      %p48 = scmp.eq.s32.totalorder %s47, 0
      %s50 = sadd.s32 %s49, 1
      %s51 = scalar_select %p48, %s49, %s50
      %p54 = pneg %p48
      %p55 = scmp.eq.s32.totalorder %s18, 1
      %p56 = por %p54, %p55
      %p57 = scmp.ne.s32.totalorder %s49, %s52
      %p58 = scmp.eq.s32.totalorder %s18, 0
      %p59 = por %p57, %p58
      %p60 = scmp.ne.s32.totalorder %s49, %s52
      %p61 = scmp.eq.s32.totalorder %s23, 1
      %p62 = por %p60, %p61
      %p63 = scmp.ne.s32.totalorder %s52, %s53
      %p64 = scmp.eq.s32.totalorder %s23, 0
      %p65 = por %p63, %p64
      %p66 = scmp.ne.s32.totalorder %s52, %s53
      %p67 = scmp.eq.s32.totalorder %s24, 1
      %p68 = por %p66, %p67
      %p70 = scmp.ne.s32.totalorder %s53, %s69
      %p71 = scmp.eq.s32.totalorder %s24, 0
      %p72 = por %p70, %p71
      %s73 = ssub.s32 %s25, %s44
      %s74 = ssub.s32 %s27, %s36
      %s75 = sor.u32 %s73, %s74
      %p76 = scmp.eq.s32.totalorder %s75, 0
      %s78 = sadd.s32 %s77, 1
      %s79 = scalar_select %p76, %s77, %s78
      %p82 = pneg %p76
      %p83 = scmp.eq.s32.totalorder %s18, 1
      %p84 = por %p82, %p83
      %p85 = scmp.ne.s32.totalorder %s77, %s80
      %p86 = scmp.eq.s32.totalorder %s18, 0
      %p87 = por %p85, %p86
      %p88 = scmp.ne.s32.totalorder %s77, %s80
      %p89 = scmp.eq.s32.totalorder %s23, 1
      %p90 = por %p88, %p89
      %p91 = scmp.ne.s32.totalorder %s80, %s81
      %p92 = scmp.eq.s32.totalorder %s23, 0
      %p93 = por %p91, %p92
      %p94 = scmp.ne.s32.totalorder %s80, %s81
      %p95 = scmp.eq.s32.totalorder %s24, 1
      %p96 = por %p94, %p95
      %p98 = scmp.ne.s32.totalorder %s81, %s97
      %p99 = scmp.eq.s32.totalorder %s24, 0
      %p100 = por %p98, %p99
      %s101 = ssub.s32 %s25, %s44
      %s102 = ssub.s32 %s27, %s36
      %s103 = sor.u32 %s101, %s102
      %p104 = scmp.eq.s32.totalorder %s103, 0
      %s106 = sadd.s32 %s105, 1
      %s107 = scalar_select %p104, %s105, %s106
      %p110 = pneg %p104
      %p111 = scmp.eq.s32.totalorder %s18, 1
      %p112 = por %p110, %p111
      %p113 = scmp.ne.s32.totalorder %s105, %s108
      %p114 = scmp.eq.s32.totalorder %s18, 0
      %p115 = por %p113, %p114
      %p116 = scmp.ne.s32.totalorder %s105, %s108
      %p117 = scmp.eq.s32.totalorder %s23, 1
      %p118 = por %p116, %p117
      %p119 = scmp.ne.s32.totalorder %s108, %s109
      %p120 = scmp.eq.s32.totalorder %s23, 0
      %p121 = por %p119, %p120
      %p122 = scmp.ne.s32.totalorder %s108, %s109
      %p123 = scmp.eq.s32.totalorder %s24, 1
      %p124 = por %p122, %p123
      %p126 = scmp.ne.s32.totalorder %s109, %s125
      %p127 = scmp.eq.s32.totalorder %s24, 0
      %p128 = por %p126, %p127
      %s129 = ssub.s32 %s25, %s44
      %s130 = ssub.s32 %s26, %s40
      %s131 = sor.u32 %s129, %s130
      %p132 = scmp.eq.s32.totalorder %s131, 0
      %s134 = sadd.s32 %s133, 1
      %s135 = scalar_select %p132, %s133, %s134
      %p138 = pneg %p132
      %p139 = scmp.eq.s32.totalorder %s18, 1
      %p140 = por %p138, %p139
      %p141 = scmp.ne.s32.totalorder %s133, %s136
      %p142 = scmp.eq.s32.totalorder %s18, 0
      %p143 = por %p141, %p142
      %p144 = scmp.ne.s32.totalorder %s133, %s136
      %p145 = scmp.eq.s32.totalorder %s23, 1
      %p146 = por %p144, %p145
      %p147 = scmp.ne.s32.totalorder %s136, %s137
      %p148 = scmp.eq.s32.totalorder %s23, 0
      %p149 = por %p147, %p148
      %p150 = scmp.ne.s32.totalorder %s136, %s137
      %p151 = scmp.eq.s32.totalorder %s24, 1
      %p152 = por %p150, %p151
      %p154 = scmp.ne.s32.totalorder %s137, %s153
      %p155 = scmp.eq.s32.totalorder %s24, 0
      %p156 = por %p154, %p155
      %p157 = scmp.le.s32.totalorder 1, %s18
      %p158 = scmp.lt.s32.totalorder %s18, 3
      %p159 = pnand %p157, %p158
      %p160 = pneg %p159
      // Predicated region
      $region9: #{tpu_custom_call.1} parent=5 // pred_check
        _
      $region10: #{tpu_custom_call.1} parent=5 // pred_check_branch
        %162 = sbr.rel (%p159) target = $region12
      $region11: #{tpu_custom_call.1} parent=5 // pred_region
        %s163 = ssub.s32 %s18, 1
      $region12: #{tpu_custom_call.1} parent=5 // pred_fallthru
        _
      %p164 = scmp.lt.s32.totalorder %s18, 2
      // Predicated region
      $region13: #{tpu_custom_call.1} parent=5 // pred_check
        %p165 = pneg %p164
      $region14: #{tpu_custom_call.1} parent=5 // pred_check_branch
        %167 = sbr.rel (%p165) target = $region16
      $region15: #{tpu_custom_call.1} parent=5 // pred_region
        // Predicated region
        $region17: #{tpu_custom_call.1} parent=15 // pred_check
          %p168 = pneg %p59
        $region18: #{tpu_custom_call.1} parent=15 // pred_check_branch
          %170 = sbr.rel (%p168) target = $region20
        $region19: #{tpu_custom_call.1} parent=15 // pred_region
          %s171 = sand.u32 %s49, 1
          %s172 = scalar_lea.sflag [#allocation7], %s171
          %s173 = sand.u32 %s49, 1
          %s174 = smul.addr %s173, 8
          %s175 = scalar_lea.vmem [#allocation6], %s174
          %s177 = ssub.s32 128, 128
          %178 = vsyncadd %s172, %s177
          %s179 = sadd.s32 %s26, %s25
          %s180 = smul.addr %s179, 128
          %s181 = scalar_lea.hbm %s0, %s180
          %s183 = sshll.u32 %s175, 4
          %s184 = int_to_ptr.vmem [resolvable:$true] %s183
          %186 = dma.hbm_to_vmem [thread:$0]  %s181, 128, %s184, %s172
        $region20: #{tpu_custom_call.1} parent=15 // pred_fallthru
          _
        // Predicated region
        $region21: #{tpu_custom_call.1} parent=15 // pred_check
          %p187 = pneg %p87
        $region22: #{tpu_custom_call.1} parent=15 // pred_check_branch
          %189 = sbr.rel (%p187) target = $region24
        $region23: #{tpu_custom_call.1} parent=15 // pred_region
          %s190 = sand.u32 %s18, 1
          %s191 = scalar_lea.sflag [#allocation10], %s190
          %s192 = sand.u32 %s77, 1
          %s193 = smul.addr %s192, 8
          %s194 = scalar_lea.vmem [#allocation9], %s193
          %s196 = ssub.s32 128, 128
          %197 = vsyncadd %s191, %s196
          %s198 = sadd.s32 %s27, %s25
          %s199 = smul.addr %s198, 128
          %s200 = scalar_lea.hbm %s1, %s199
          %s202 = sshll.u32 %s194, 4
          %s203 = int_to_ptr.vmem [resolvable:$true] %s202
          %205 = dma.hbm_to_vmem [thread:$0]  %s200, 128, %s203, %s191
        $region24: #{tpu_custom_call.1} parent=15 // pred_fallthru
          _
        // Predicated region
        $region25: #{tpu_custom_call.1} parent=15 // pred_check
          %p206 = pneg %p115
        $region26: #{tpu_custom_call.1} parent=15 // pred_check_branch
          %208 = sbr.rel (%p206) target = $region28
        $region27: #{tpu_custom_call.1} parent=15 // pred_region
          %s209 = sand.u32 %s18, 1
          %s210 = scalar_lea.sflag [#allocation10], %s209
          %s211 = sand.u32 %s105, 1
          %s212 = smul.addr %s211, 8
          %s213 = scalar_lea.vmem [#allocation11], %s212
          %s215 = ssub.s32 128, 128
          %216 = vsyncadd %s210, %s215
          %s217 = sadd.s32 %s27, %s25
          %s218 = smul.addr %s217, 128
          %s219 = scalar_lea.hbm %s2, %s218
          %s221 = sshll.u32 %s213, 4
          %s222 = int_to_ptr.vmem [resolvable:$true] %s221
          %224 = dma.hbm_to_vmem [thread:$0]  %s219, 128, %s222, %s210
        $region28: #{tpu_custom_call.1} parent=15 // pred_fallthru
          _
      $region16: #{tpu_custom_call.1} parent=5 // pred_fallthru
        _
      %p225 = scmp.le.s32.totalorder 1, %s18
      %p226 = scmp.lt.s32.totalorder %s18, 3
      %p227 = pnand %p225, %p226
      %p228 = pneg %p227
      // Predicated region
      $region29: #{tpu_custom_call.1} parent=5 // pred_check
        _
      $region30: #{tpu_custom_call.1} parent=5 // pred_check_branch
        %230 = sbr.rel (%p227) target = $region32
      $region31: #{tpu_custom_call.1} parent=5 // pred_region
        %s231 = ssub.s32 %s18, 1
        %s232 = sand.u32 %s52, 1
        %s233 = scalar_lea.sflag [#allocation7], %s232
        %s234 = sand.u32 %s52, 1
        %s235 = smul.addr %s234, 8
        %s236 = scalar_lea.vmem [#allocation6], %s235
        // Predicated region
        $region33: #{tpu_custom_call.1} parent=31 // pred_check
          %p237 = pneg %p65
        $region34: #{tpu_custom_call.1} parent=31 // pred_check_branch
          %239 = sbr.rel (%p237) target = $region36
        $region35: #{tpu_custom_call.1} parent=31 // pred_region
          %240 = dma.done %s233, 128
        $region36: #{tpu_custom_call.1} parent=31 // pred_fallthru
          _
        %s241 = sand.u32 %s23, 1
        %s242 = scalar_lea.sflag [#allocation10], %s241
        %s243 = sand.u32 %s80, 1
        %s244 = smul.addr %s243, 8
        %s245 = scalar_lea.vmem [#allocation9], %s244
        // Predicated region
        $region37: #{tpu_custom_call.1} parent=31 // pred_check
          %p246 = pneg %p93
        $region38: #{tpu_custom_call.1} parent=31 // pred_check_branch
          %248 = sbr.rel (%p246) target = $region40
        $region39: #{tpu_custom_call.1} parent=31 // pred_region
          %249 = dma.done %s242, 128
        $region40: #{tpu_custom_call.1} parent=31 // pred_fallthru
          _
        %s250 = sand.u32 %s23, 1
        %s251 = scalar_lea.sflag [#allocation10], %s250
        %s252 = sand.u32 %s108, 1
        %s253 = smul.addr %s252, 8
        %s254 = scalar_lea.vmem [#allocation11], %s253
        // Predicated region
        $region41: #{tpu_custom_call.1} parent=31 // pred_check
          %p255 = pneg %p121
        $region42: #{tpu_custom_call.1} parent=31 // pred_check_branch
          %257 = sbr.rel (%p255) target = $region44
        $region43: #{tpu_custom_call.1} parent=31 // pred_region
          %258 = dma.done %s251, 128
        $region44: #{tpu_custom_call.1} parent=31 // pred_fallthru
          _
        %s259 = sand.u32 %s52, 1
        %s260 = scalar_lea.sflag [#allocation7], %s259
        %s261 = sand.u32 %s52, 1
        %s262 = smul.addr %s261, 8
        %s263 = scalar_lea.vmem [#allocation6], %s262
        %p264 = pneg %p65
        %p265 = pneg %p62
        %s266 = sand.u32 %s23, 1
        %s267 = scalar_lea.sflag [#allocation10], %s266
        %s268 = sand.u32 %s80, 1
        %s269 = smul.addr %s268, 8
        %s270 = scalar_lea.vmem [#allocation9], %s269
        %p271 = pneg %p93
        %p272 = pneg %p90
        %s273 = sand.u32 %s23, 1
        %s274 = scalar_lea.sflag [#allocation10], %s273
        %s275 = sand.u32 %s108, 1
        %s276 = smul.addr %s275, 8
        %s277 = scalar_lea.vmem [#allocation11], %s276
        %p278 = pneg %p121
        %p279 = pneg %p118
        %p280 = pneg %p149
        %p281 = pneg %p146
        %s282 = sand.u32 %s136, 1
        %s283 = scalar_lea.sflag [#allocation8], %s282
        %s284 = sand.u32 %s136, 1
        %s285 = smul.addr %s284, 8
        %s286 = scalar_lea.vmem [#allocation12], %s285
        %p287 = scmp.eq.s32.totalorder %s30, 0
        // Predicated region
        $region45: #{tpu_custom_call.1} parent=31 // pred_check
          %p288 = pneg %p287
        $region46: #{tpu_custom_call.1} parent=31 // pred_check_branch
          %290 = sbr.rel (%p288) target = $region48
        $region47: #{tpu_custom_call.1} parent=31 // pred_region
          %v291 = vld [vmem:[%s236] sm:$0xff]
          %v292 = vmul.f32 %v291, 0.17677669
          %vm293 = vcmask 261120
          %294 = vst.msk [vmem:[#allocation2] sm:$0xff] %vm293, %v292
          %vm295 = vcmask 7168
          %296 = vst.msk [vmem:[#allocation3] sm:$0xff] %vm295, -inf
          %297 = vst.msk [vmem:[#allocation4] sm:$0xff] %vm295, 0.0
          %298 = vst.msk [vmem:[#allocation5] sm:$0xff] %vm293, 0.0
        $region48: #{tpu_custom_call.1} parent=31 // pred_fallthru
          _
        %v299 = vld [vmem:[#allocation2] sm:$0xff]
        %v300 = vld [vmem:[%s245] sm:$0xff]
        %vm301 = vcmask 261120
        %v303 = vsel %vm301, %v299, 0
        %v306 = vsel %vm301, %v300, 0
        %308 = vmatprep.subr.mxu0 0.0
        %309 = vmatpush1.xpose.msra.mxu0 %v306
        %310 = vmatprep.subr.mxu0 0.0
        %311 = vmatpush1.xpose.msra.mxu0 0.0
        %312 = vmatprep.subr.mxu0 0.0
        %313 = vmatpush1.xpose.msra.mxu0 0.0
        %314 = vmatprep.subr.mxu0 0.0
        %315 = vmatpush1.xpose.msra.mxu0 0.0
        %316 = vmatprep.subr.mxu0 0.0
        %317 = vmatpush1.xpose.msra.mxu0 0.0
        %318 = vmatprep.subr.mxu0 0.0
        %319 = vmatpush1.xpose.msra.mxu0 0.0
        %320 = vmatprep.subr.mxu0 0.0
        %321 = vmatpush1.xpose.msra.mxu0 0.0
        %322 = vmatprep.subr.mxu0 0.0
        %323 = vmatpush1.xpose.msra.mxu0 0.0
        %324 = vmatprep.subr.mxu0 0.0
        %325 = vmatpush1.xpose.msra.mxu0 0.0
        %326 = vmatprep.subr.mxu0 0.0
        %327 = vmatpush1.xpose.msra.mxu0 0.0
        %328 = vmatprep.subr.mxu0 0.0
        %329 = vmatpush1.xpose.msra.mxu0 0.0
        %330 = vmatprep.subr.mxu0 0.0
        %331 = vmatpush1.xpose.msra.mxu0 0.0
        %332 = vmatprep.subr.mxu0 0.0
        %333 = vmatpush1.xpose.msra.mxu0 0.0
        %334 = vmatprep.subr.mxu0 0.0
        %335 = vmatpush1.xpose.msra.mxu0 0.0
        %336 = vmatprep.subr.mxu0 0.0
        %337 = vmatpush1.xpose.msra.mxu0 0.0
        %338 = vmatprep.subr.mxu0 0.0
        %339 = vmatpush1.xpose.msra.mxu0 0.0
        %340 = vmatprep.subr.mxu0 0.0
        %341 = vmatpush1.xpose.msra.mxu0 0.0
        %342 = vmatprep.subr.mxu0 0.0
        %343 = vmatpush1.xpose.msra.mxu0 0.0
        %344 = vmatprep.subr.mxu0 0.0
        %345 = vmatpush1.xpose.msra.mxu0 0.0
        %346 = vmatprep.subr.mxu0 0.0
        %347 = vmatpush1.xpose.msra.mxu0 0.0
        %348 = vmatprep.subr.mxu0 0.0
        %349 = vmatpush1.xpose.msra.mxu0 0.0
        %350 = vmatprep.subr.mxu0 0.0
        %351 = vmatpush1.xpose.msra.mxu0 0.0
        %352 = vmatprep.subr.mxu0 0.0
        %353 = vmatpush1.xpose.msra.mxu0 0.0
        %354 = vmatprep.subr.mxu0 0.0
        %355 = vmatpush1.xpose.msra.mxu0 0.0
        %356 = vmatprep.subr.mxu0 0.0
        %357 = vmatpush1.xpose.msra.mxu0 0.0
        %358 = vmatprep.subr.mxu0 0.0
        %359 = vmatpush1.xpose.msra.mxu0 0.0
        %360 = vmatprep.subr.mxu0 0.0
        %361 = vmatpush1.xpose.msra.mxu0 0.0
        %362 = vmatprep.subr.mxu0 0.0
        %363 = vmatpush1.xpose.msra.mxu0 0.0
        %364 = vmatprep.subr.mxu0 0.0
        %365 = vmatpush1.xpose.msra.mxu0 0.0
        %366 = vmatprep.subr.mxu0 0.0
        %367 = vmatpush1.xpose.msra.mxu0 0.0
        %368 = vmatprep.subr.mxu0 0.0
        %369 = vmatpush1.xpose.msra.mxu0 0.0
        %370 = vmatprep.subr.mxu0 0.0
        %371 = vmatpush1.xpose.msra.mxu0 0.0
        %372 = vmatprep.mubr.f32.mxu0 0.0
        %373 = vmatmul.mubr.f32.gmra.mrb[0].mxu0 %v303
        %v374 = vpop.f32.mrb[0].mxu0
        %v375 = vadd.f32 0.0, %v374
        %v376 = vpop.f32.mrb[0].mxu0
        %377 = vdwg.mxu0
        %v378 = vld [vmem:[#allocation3] sm:$0xff]
        %vm379 = vcmask 64512
        %v380 = vsel %vm379, %v375, -inf
        %381 = vmax.xlane.f32.xlu0 %v380
        %v382 = vpop.xlane.xlu0 %381
        %v383 = vmax.f32 %v378, %v382
        %v384 = vsub.f32 %v378, %v383
        %v385 = vmul.f32 %v384, 1.442695
        %v386 = vpow.pop %v385
        %388 = vset.pattern.permute.xlu0 0
        %389 = vperm.xlu0 %388, %v383
        %v390 = vpop.permute.xlu0 %389
        %v392 = vsub.f32 %v375, %v390
        %v393 = vmul.f32 %v392, 1.442695
        %v394 = vpow.pop %v393
        %v395 = vld [vmem:[#allocation4] sm:$0xff]
        %v396 = vmul.f32 %v386, %v395
        %v397 = vsel %vm379, %v394, 0.0
        %398 = vadd.xlane.f32.xlu0 %v397
        %v399 = vpop.xlane.xlu0 %398
        %v400 = vadd.f32 %v396, %v399
        %vm401 = vcmask 7168
        %402 = vst.msk [vmem:[#allocation4] sm:$0xff] %vm401, %v400
        %v403 = vld [vmem:[#allocation5] sm:$0xff]
        %405 = vset.pattern.permute.xlu0 0
        %406 = vperm.xlu0 %405, %v386
        %v407 = vpop.permute.xlu0 %406
        %v409 = vmul.f32 %v407, %v403
        %v410 = vld [vmem:[%s254] sm:$0xff]
        %v412 = vsel %vm379, %v394, 0
        %414 = vmatprep.subr.mxu0 0.0
        %415 = vmatpush1.msra.mxu0 %v410
        %416 = vmatprep.subr.mxu0 0.0
        %417 = vmatpush1.msra.mxu0 0.0
        %418 = vmatprep.subr.mxu0 0.0
        %419 = vmatpush1.msra.mxu0 0.0
        %420 = vmatprep.subr.mxu0 0.0
        %421 = vmatpush1.msra.mxu0 0.0
        %422 = vmatprep.subr.mxu0 0.0
        %423 = vmatpush1.msra.mxu0 0.0
        %424 = vmatprep.subr.mxu0 0.0
        %425 = vmatpush1.msra.mxu0 0.0
        %426 = vmatprep.subr.mxu0 0.0
        %427 = vmatpush1.msra.mxu0 0.0
        %428 = vmatprep.subr.mxu0 0.0
        %429 = vmatpush1.msra.mxu0 0.0
        %430 = vmatprep.subr.mxu0 0.0
        %431 = vmatpush1.msra.mxu0 0.0
        %432 = vmatprep.subr.mxu0 0.0
        %433 = vmatpush1.msra.mxu0 0.0
        %434 = vmatprep.subr.mxu0 0.0
        %435 = vmatpush1.msra.mxu0 0.0
        %436 = vmatprep.subr.mxu0 0.0
        %437 = vmatpush1.msra.mxu0 0.0
        %438 = vmatprep.subr.mxu0 0.0
        %439 = vmatpush1.msra.mxu0 0.0
        %440 = vmatprep.subr.mxu0 0.0
        %441 = vmatpush1.msra.mxu0 0.0
        %442 = vmatprep.subr.mxu0 0.0
        %443 = vmatpush1.msra.mxu0 0.0
        %444 = vmatprep.subr.mxu0 0.0
        %445 = vmatpush1.msra.mxu0 0.0
        %446 = vmatprep.subr.mxu0 0.0
        %447 = vmatpush1.msra.mxu0 0.0
        %448 = vmatprep.subr.mxu0 0.0
        %449 = vmatpush1.msra.mxu0 0.0
        %450 = vmatprep.subr.mxu0 0.0
        %451 = vmatpush1.msra.mxu0 0.0
        %452 = vmatprep.subr.mxu0 0.0
        %453 = vmatpush1.msra.mxu0 0.0
        %454 = vmatprep.subr.mxu0 0.0
        %455 = vmatpush1.msra.mxu0 0.0
        %456 = vmatprep.subr.mxu0 0.0
        %457 = vmatpush1.msra.mxu0 0.0
        %458 = vmatprep.subr.mxu0 0.0
        %459 = vmatpush1.msra.mxu0 0.0
        %460 = vmatprep.subr.mxu0 0.0
        %461 = vmatpush1.msra.mxu0 0.0
        %462 = vmatprep.subr.mxu0 0.0
        %463 = vmatpush1.msra.mxu0 0.0
        %464 = vmatprep.subr.mxu0 0.0
        %465 = vmatpush1.msra.mxu0 0.0
        %466 = vmatprep.subr.mxu0 0.0
        %467 = vmatpush1.msra.mxu0 0.0
        %468 = vmatprep.subr.mxu0 0.0
        %469 = vmatpush1.msra.mxu0 0.0
        %470 = vmatprep.subr.mxu0 0.0
        %471 = vmatpush1.msra.mxu0 0.0
        %472 = vmatprep.subr.mxu0 0.0
        %473 = vmatpush1.msra.mxu0 0.0
        %474 = vmatprep.subr.mxu0 0.0
        %475 = vmatpush1.msra.mxu0 0.0
        %476 = vmatprep.subr.mxu0 0.0
        %477 = vmatpush1.msra.mxu0 0.0
        %478 = vmatprep.mubr.f32.mxu0 0.0
        %479 = vmatmul.mubr.f32.gmra.mrb[0].mxu0 %v412
        %v480 = vpop.f32.mrb[0].mxu0
        %v481 = vadd.f32 0.0, %v480
        %v482 = vpop.f32.mrb[0].mxu0
        %483 = vdwg.mxu0
        %v484 = vadd.f32 %v409, %v481
        %485 = vst.msk [vmem:[#allocation5] sm:$0xff] %vm301, %v484
        %486 = vst.msk [vmem:[#allocation3] sm:$0xff] %vm401, %v383
        // Predicated region
        $region49: #{tpu_custom_call.1} parent=31 // pred_check
          %p487 = pneg %p287
        $region50: #{tpu_custom_call.1} parent=31 // pred_check_branch
          %489 = sbr.rel (%p487) target = $region52
        $region51: #{tpu_custom_call.1} parent=31 // pred_region
          %v490 = vld [vmem:[#allocation4] sm:$0xff]
          %v491 = vrcp.pop %v490
          %v492 = vld [vmem:[#allocation5] sm:$0xff]
          %494 = vset.pattern.permute.xlu0 0
          %495 = vperm.xlu0 %494, %v491
          %v496 = vpop.permute.xlu0 %495
          %v498 = vmul.f32 %v492, %v496
          %499 = vst.msk [vmem:[%s286] sm:$0xff] %vm301, %v498
        $region52: #{tpu_custom_call.1} parent=31 // pred_fallthru
          _
        %s500 = sand.u32 %s136, 1
        %s501 = scalar_lea.sflag [#allocation8], %s500
        %s502 = sand.u32 %s136, 1
        %s503 = smul.addr %s502, 8
        %s504 = scalar_lea.vmem [#allocation12], %s503
        // Predicated region
        $region53: #{tpu_custom_call.1} parent=31 // pred_check
          %p505 = pneg %p146
        $region54: #{tpu_custom_call.1} parent=31 // pred_check_branch
          %507 = sbr.rel (%p505) target = $region56
        $region55: #{tpu_custom_call.1} parent=31 // pred_region
          %s509 = ssub.s32 128, 128
          %510 = vsyncadd %s501, %s509
          %s511 = sadd.s32 %s29, %s28
          %s512 = smul.addr %s511, 128
          %s513 = scalar_lea.hbm %s3, %s512
          %s515 = sshll.u32 %s504, 4
          %s516 = int_to_ptr.vmem [resolvable:$true] %s515
          %518 = dma.vmem_to_hbm [thread:$0]  %s516, 128, %s513, %s501
        $region56: #{tpu_custom_call.1} parent=31 // pred_fallthru
          _
      $region32: #{tpu_custom_call.1} parent=5 // pred_fallthru
        _
      %p519 = scmp.le.s32.totalorder 2, %s18
      // Predicated region
      $region57: #{tpu_custom_call.1} parent=5 // pred_check
        %p520 = pneg %p519
      $region58: #{tpu_custom_call.1} parent=5 // pred_check_branch
        %522 = sbr.rel (%p520) target = $region60
      $region59: #{tpu_custom_call.1} parent=5 // pred_region
        %s523 = ssub.s32 %s18, 2
        // Predicated region
        $region61: #{tpu_custom_call.1} parent=59 // pred_check
          %p524 = pneg %p152
        $region62: #{tpu_custom_call.1} parent=59 // pred_check_branch
          %526 = sbr.rel (%p524) target = $region64
        $region63: #{tpu_custom_call.1} parent=59 // pred_region
          %s527 = sand.u32 %s137, 1
          %s528 = scalar_lea.sflag [#allocation8], %s527
          %s529 = sand.u32 %s137, 1
          %s530 = smul.addr %s529, 8
          %s531 = scalar_lea.vmem [#allocation12], %s530
          %532 = dma.done %s528, 128
        $region64: #{tpu_custom_call.1} parent=59 // pred_fallthru
          _
      $region60: #{tpu_custom_call.1} parent=5 // pred_fallthru
        _
    $region6: #{tpu_custom_call.1} parent=1 // loop_footer
      %s22 = sadd.s32 1, %s18
    $region7: #{tpu_custom_call.1} parent=1 // loop_footer_branch
      %17 = sbr.rel target = $region3
    $region8: #{tpu_custom_call.1} parent=1 // loop_exit
      _
    %533 = vsyncpa [#allocation7], 1
    %s534 = scalar_lea.sflag [#allocation7], 1
    %535 = vsyncpa %s534, 1
    %536 = vsyncpa [#allocation10], 1
    %s537 = scalar_lea.sflag [#allocation10], 1
    %538 = vsyncpa %s537, 1
    %539 = vsyncpa [#allocation8], 1
    %s540 = scalar_lea.sflag [#allocation8], 1
    %541 = vsyncpa %s540, 1

</llo_original>
